<compile_context>
chip_gen: v7x
topology: tpu7x:2x2x1
jax: 0.10.0
libtpu: 0.0.40
codegen_flags: <defaults>
</compile_context>

<pallas_src>
import functools

import jax
import jax.numpy as jnp
from jax.experimental import pallas as pl
from jax.experimental.pallas import tpu as pltpu

LN_EPS = 1e-5  # nn.LayerNorm default


# ----------------------------- kernel ---------------------------------------


def embedding_kernel(x_ref, w_ref, posb_ref, gamma_ref, beta_ref, o_ref, *scratch,
                     n_k, eps, compute_dtype):
    # x_ref:    (TM, TK)  native dtype (f32) -> cast to compute_dtype in-kernel
    # w_ref:    (TK, D)   compute_dtype (bf16) class_embedding weight^T slice
    # posb_ref: (TM, D)   compute_dtype pos_embedding rows (+ Linear bias)
    # gamma/beta_ref: (1, D) f32
    # o_ref:    (TM, D)   out_dtype
    part = jnp.dot(x_ref[...].astype(compute_dtype), w_ref[...],
                   preferred_element_type=jnp.float32)          # (TM, D) f32

    def finalize(h32):
        h = h32 + posb_ref[...].astype(jnp.float32)             # add pos + bias
        mean = jnp.mean(h, axis=-1, keepdims=True)               # LayerNorm, f32
        c = h - mean
        var = jnp.mean(c * c, axis=-1, keepdims=True)
        y = c * jax.lax.rsqrt(var + eps)
        o_ref[...] = (y * gamma_ref[...] + beta_ref[...]).astype(o_ref.dtype)

    if n_k == 1:
        # Whole V resident: no accumulator round-trip needed.
        finalize(part)
    else:
        # K-tiled over V (grid axis 1, "arbitrary"): accumulate in f32 VMEM.
        acc_ref = scratch[0]
        k = pl.program_id(1)

        @pl.when(k == 0)
        def _():
            acc_ref[...] = part

        @pl.when(k > 0)
        def _():
            acc_ref[...] += part

        @pl.when(k == n_k - 1)
        def _():
            finalize(acc_ref[...])


# --------------------------- tiling heuristics -------------------------------


def _footprint(tm, tk, n_k, d, x_item, out_item):
    """Honest VMEM bytes: double-buffered streams + single-buffered residents."""
    w_bufs = 1 if n_k == 1 else 2          # Buffered(1) only when index is constant
    f = 2 * tm * tk * x_item               # x tile, double-buffered, native dtype
    f += w_bufs * tk * d * 2               # bf16 weight tile(s)
    f += tm * d * 2                        # bf16 pos+bias tile (resident, 1 buffer)
    f += 2 * d * 4                         # gamma, beta (resident)
    f += 2 * tm * d * out_item             # output tile, double-buffered
    if n_k > 1:
        f += tm * d * 4                    # f32 accumulator scratch
    f += 4 * tm * d * 4                    # f32 intermediates headroom
    f += 2 << 20                           # compiler-internal scratch headroom
    return f


def _tb_candidates(B, S, rows_per_tile, sub):
    """Divisors of B (=> no row padding), ordered by preference."""
    target = max(1, rows_per_tile // S)
    divs = [d for d in range(1, B + 1) if B % d == 0]
    # A non-full row tile needs TM % 8 == 0; TB == B (full rows) is always legal.
    cands = [d for d in divs if (d * S) % 8 == 0 or d == B]

    def key(d):
        tm = d * S
        return (
            (B // d) >= 2 or B == 1,   # >= 2 grid tiles so both v7x TCs get work
            tm % sub == 0,             # packing-friendly sublane count for out dtype
            d <= target,               # stay near the requested rows_per_tile
            d,                         # then the biggest tile
        )

    cands.sort(key=key, reverse=True)
    return cands


def _pick_k_tiling(V, d, tm, x_item, out_item, budget):
    """TK = V if it fits (weight resident); otherwise a 128-multiple divisor of V."""
    if _footprint(tm, V, 1, d, x_item, out_item) <= budget or V % 128 != 0:
        return V, 1
    best = 128
    tk = 128
    while tk < V:
        if V % tk == 0 and _footprint(tm, tk, V // tk, d, x_item, out_item) <= budget:
            best = tk
        tk += 128
    return best, V // best


# ------------------------------ wrapper --------------------------------------


def embedding_forward(x, w_t, b, pos_table, gamma, beta, *,
                      out_dtype=jnp.bfloat16, compute_dtype=jnp.bfloat16,
                      rows_per_tile=512):
    """x: (B, S, V); w_t: (V, D) (Linear weight^T); b: (D,); pos_table: (max_len, D);
    gamma, beta: (D,).  Returns (B, S, D) in out_dtype."""
    B, S, V = x.shape
    D = w_t.shape[1]
    R = B * S
    x_item = jnp.dtype(x.dtype).itemsize
    out_item = jnp.dtype(out_dtype).itemsize
    c_item = jnp.dtype(compute_dtype).itemsize

    # ---- per-generation VMEM budget (~50 MiB on v7x, ~100 MiB on v5e/v6e) ----
    try:
        phys = getattr(pltpu.get_tpu_info(), "vmem_capacity_bytes", 64 << 20)
    except Exception:
        phys = 64 << 20
    budget = int(phys * 0.78)

    # ---- row tile: divisor of B (no row pad), >=2 tiles when B > 1 -----------
    sub = 16 if out_item < 4 else 8
    chosen = None
    for tb_c in _tb_candidates(B, S, rows_per_tile, sub):
        tm_c = tb_c * S
        tk_c, nk_c = _pick_k_tiling(V, D, tm_c, x_item, out_item, budget)
        fp_c = _footprint(tm_c, tk_c, nk_c, D, x_item, out_item)
        if fp_c <= budget:
            chosen = (tb_c, tm_c, tk_c, nk_c, fp_c)
            break
        if chosen is None or fp_c < chosen[4]:
            chosen = (tb_c, tm_c, tk_c, nk_c, fp_c)   # best-effort fallback
    tb, tm, tk, n_k, fp = chosen
    n_tiles = B // tb
    vmem_limit = int(min(budget, max(fp, 8 << 20)))

    # ---- one-time parameter prep (tiny vs. the activation streams) -----------
    w_c = w_t.astype(compute_dtype)                                        # (V, D)
    posb = pos_table[:S].astype(jnp.float32) + b.astype(jnp.float32)       # fold bias
    posb_tile = jnp.tile(posb, (tb, 1)).astype(compute_dtype)              # (TM, D) bf16
    gamma2 = gamma.astype(jnp.float32).reshape(1, D)
    beta2 = beta.astype(jnp.float32).reshape(1, D)
    x2 = x.reshape(R, V)          # layout-preserving reshape; dtype untouched

    # ---- BlockSpecs: constant-index operands single-buffered -----------------
    resident = pl.Buffered(1)
    x_spec = pl.BlockSpec((tm, tk), lambda i, k: (i, k))
    if n_k == 1:
        w_spec = pl.BlockSpec((tk, D), lambda i, k: (k, 0), pipeline_mode=resident)
    else:
        w_spec = pl.BlockSpec((tk, D), lambda i, k: (k, 0))
    posb_spec = pl.BlockSpec((tm, D), lambda i, k: (0, 0), pipeline_mode=resident)
    gamma_spec = pl.BlockSpec((1, D), lambda i, k: (0, 0), pipeline_mode=resident)
    beta_spec = pl.BlockSpec((1, D), lambda i, k: (0, 0), pipeline_mode=resident)
    out_spec = pl.BlockSpec((tm, D), lambda i, k: (i, 0))
    scratch = [] if n_k == 1 else [pltpu.VMEM((tm, D), jnp.float32)]

    cost = pl.CostEstimate(
        flops=2 * R * V * D,
        transcendentals=0,
        bytes_accessed=(R * V * x_item + V * D * c_item + tm * D * c_item
                        + 2 * D * 4 + R * D * out_item),
    )

    out2 = pl.pallas_call(
        functools.partial(embedding_kernel, n_k=n_k, eps=LN_EPS,
                          compute_dtype=compute_dtype),
        out_shape=jax.ShapeDtypeStruct((R, D), out_dtype),
        grid_spec=pltpu.PrefetchScalarGridSpec(
            num_scalar_prefetch=0,
            grid=(n_tiles, n_k),
            in_specs=[x_spec, w_spec, posb_spec, gamma_spec, beta_spec],
            out_specs=out_spec,
            scratch_shapes=scratch,
        ),
        compiler_params=pltpu.CompilerParams(
            dimension_semantics=("parallel", "arbitrary"),
            vmem_limit_bytes=vmem_limit,
        ),
        cost_estimate=cost,
    )(x2, w_c, posb_tile, gamma2, beta2)

    # No padding anywhere -> no slicing; only a free metadata reshape.
    return out2.reshape(B, S, D)


# ------------------------------- demo ----------------------------------------


if __name__ == "__main__":
    # small shapes consistent with the module: (B, S, V) -> (B, S, D)
    B, S, V, D, MAX_LEN = 4, 8, 16, 32, 64

    key = jax.random.PRNGKey(0)
    k_x, k_w, k_b, k_pos = jax.random.split(key, 4)

    x = jax.random.normal(k_x, (B, S, V), dtype=jnp.float32)

    # deterministic synthetic parameters (not a checkpoint)
    w_t = jax.random.normal(k_w, (V, D), dtype=jnp.float32) * 0.05   # Linear weight^T
    b = jax.random.normal(k_b, (D,), dtype=jnp.float32) * 0.05       # Linear bias
    pos_table = jax.random.normal(k_pos, (MAX_LEN, D), dtype=jnp.float32)
    gamma = jnp.ones((D,), dtype=jnp.float32)                        # LayerNorm weight
    beta = jnp.zeros((D,), dtype=jnp.float32)                        # LayerNorm bias

    out = embedding_forward(x, w_t, b, pos_table, gamma, beta)
    jax.block_until_ready(out)

    # Reference in plain JAX, mirroring the kernel's documented precision:
    # bf16-rounded matmul inputs and bf16-rounded (pos + bias); LN in f32.
    x_bf = x.astype(jnp.bfloat16).astype(jnp.float32)
    w_bf = w_t.astype(jnp.bfloat16).astype(jnp.float32)
    pb_bf = (pos_table[:S] + b).astype(jnp.bfloat16).astype(jnp.float32)
    h_ref = x_bf @ w_bf + pb_bf[None]
    mean = h_ref.mean(-1, keepdims=True)
    var = ((h_ref - mean) ** 2).mean(-1, keepdims=True)
    ref = (h_ref - mean) / jnp.sqrt(var + LN_EPS) * gamma + beta

    assert out.shape == (B, S, D)
    assert out.dtype == jnp.bfloat16
    max_err = jnp.max(jnp.abs(out.astype(jnp.float32) - ref))
    assert max_err < 3e-2, f"max abs error {max_err}"

    print("KERNEL_OK")
</pallas_src>

<mosaic_0001>
module attributes {stable_mosaic.version = 11 : i64} {
  func.func @embedding_kernel(%arg0: i32, %arg1: i32, %arg2: memref<16x16xf32, #tpu.memory_space<vmem>>, %arg3: memref<16x32xbf16, #tpu.memory_space<vmem>>, %arg4: memref<16x32xbf16, #tpu.memory_space<vmem>>, %arg5: memref<1x32xf32, #tpu.memory_space<vmem>>, %arg6: memref<1x32xf32, #tpu.memory_space<vmem>>, %arg7: memref<16x32xbf16, #tpu.memory_space<vmem>>) attributes {dimension_semantics = [#tpu.dimension_semantics<parallel>, #tpu.dimension_semantics<arbitrary>], iteration_bounds = array<i64: 2, 1>, scalar_prefetch = 0 : i64, scratch_operands = 0 : i64, tpu.core_type = #tpu.core_type<tc>, window_params = [{transform_indices = @transform_0, window_bounds = array<i64: 16, 16>}, {pipeline_mode = #tpu.pipeline_mode<synchronous>, transform_indices = @transform_1, window_bounds = array<i64: 16, 32>}, {pipeline_mode = #tpu.pipeline_mode<synchronous>, transform_indices = @transform_2, window_bounds = array<i64: 16, 32>}, {pipeline_mode = #tpu.pipeline_mode<synchronous>, transform_indices = @transform_3, window_bounds = array<i64: 1, 32>}, {pipeline_mode = #tpu.pipeline_mode<synchronous>, transform_indices = @transform_4, window_bounds = array<i64: 1, 32>}, {transform_indices = @transform_5, window_bounds = array<i64: 16, 32>}]} {
    %c0 = arith.constant 0 : index
    %c0_0 = arith.constant 0 : index
    %0 = vector.load %arg2[%c0, %c0_0] : memref<16x16xf32, #tpu.memory_space<vmem>>, vector<16x16xf32>
    %1 = arith.truncf %0 : vector<16x16xf32> to vector<16x16xbf16>
    %c0_1 = arith.constant 0 : index
    %c0_2 = arith.constant 0 : index
    %2 = vector.load %arg3[%c0_1, %c0_2] : memref<16x32xbf16, #tpu.memory_space<vmem>>, vector<16x32xbf16>
    %cst = arith.constant dense<0.000000e+00> : vector<16x32xf32>
    %3 = tpu.matmul %1, %2, %cst {dimension_numbers = #tpu.dot_dimension_numbers<[1], [0], [0], [1], [0, 0, 1, 1], [], []>} : vector<16x16xbf16>, vector<16x32xbf16>, vector<16x32xf32> -> vector<16x32xf32>
    %c0_3 = arith.constant 0 : index
    %c0_4 = arith.constant 0 : index
    %4 = vector.load %arg4[%c0_3, %c0_4] : memref<16x32xbf16, #tpu.memory_space<vmem>>, vector<16x32xbf16>
    %5 = arith.extf %4 : vector<16x32xbf16> to vector<16x32xf32>
    %6 = arith.addf %3, %5 : vector<16x32xf32>
    %cst_5 = arith.constant dense<0.000000e+00> : vector<16xf32>
    %7 = vector.multi_reduction <add>, %6, %cst_5 [1] : vector<16x32xf32> to vector<16xf32>
    %8 = vector.shape_cast %7 : vector<16xf32> to vector<16x1xf32>
    %cst_6 = arith.constant 3.200000e+01 : f32
    %9 = vector.broadcast %cst_6 : f32 to vector<16x1xf32>
    %10 = arith.divf %8, %9 : vector<16x1xf32>
    %11 = vector.broadcast %10 : vector<16x1xf32> to vector<16x32xf32>
    %12 = arith.subf %6, %11 : vector<16x32xf32>
    %13 = arith.mulf %12, %12 : vector<16x32xf32>
    %cst_7 = arith.constant dense<0.000000e+00> : vector<16xf32>
    %14 = vector.multi_reduction <add>, %13, %cst_7 [1] : vector<16x32xf32> to vector<16xf32>
    %15 = vector.shape_cast %14 : vector<16xf32> to vector<16x1xf32>
    %cst_8 = arith.constant 3.200000e+01 : f32
    %16 = vector.broadcast %cst_8 : f32 to vector<16x1xf32>
    %17 = arith.divf %15, %16 : vector<16x1xf32>
    %cst_9 = arith.constant 9.99999974E-6 : f32
    %18 = vector.broadcast %cst_9 : f32 to vector<16x1xf32>
    %19 = arith.addf %17, %18 : vector<16x1xf32>
    %20 = math.rsqrt %19 : vector<16x1xf32>
    %21 = vector.broadcast %20 : vector<16x1xf32> to vector<16x32xf32>
    %22 = arith.mulf %12, %21 : vector<16x32xf32>
    %c0_10 = arith.constant 0 : index
    %c0_11 = arith.constant 0 : index
    %23 = vector.load %arg5[%c0_10, %c0_11] : memref<1x32xf32, #tpu.memory_space<vmem>>, vector<1x32xf32>
    %24 = vector.broadcast %23 : vector<1x32xf32> to vector<16x32xf32>
    %25 = arith.mulf %22, %24 : vector<16x32xf32>
    %c0_12 = arith.constant 0 : index
    %c0_13 = arith.constant 0 : index
    %26 = vector.load %arg6[%c0_12, %c0_13] : memref<1x32xf32, #tpu.memory_space<vmem>>, vector<1x32xf32>
    %27 = vector.broadcast %26 : vector<1x32xf32> to vector<16x32xf32>
    %28 = arith.addf %25, %27 : vector<16x32xf32>
    %29 = arith.truncf %28 : vector<16x32xf32> to vector<16x32xbf16>
    %c0_14 = arith.constant 0 : index
    %c0_15 = arith.constant 0 : index
    %30 = vector.load %arg7[%c0_14, %c0_15] : memref<16x32xbf16, #tpu.memory_space<vmem>>, vector<16x32xbf16>
    tpu.vector_store %arg7[%c0_14, %c0_15], %29 {strides = array<i32>} : memref<16x32xbf16, #tpu.memory_space<vmem>>, vector<16x32xbf16>,
    return
  }
  func.func @transform_0(%arg0: i32, %arg1: i32) -> (i32, i32) {
    %c0_i32 = arith.constant 0 : i32
    return %arg0, %arg1 : i32, i32
  }
  func.func @transform_1(%arg0: i32, %arg1: i32) -> (i32, i32) {
    %c0_i32 = arith.constant 0 : i32
    %c0_i32_0 = arith.constant 0 : i32
    return %arg1, %c0_i32 : i32, i32
  }
  func.func @transform_2(%arg0: i32, %arg1: i32) -> (i32, i32) {
    %c0_i32 = arith.constant 0 : i32
    %c0_i32_0 = arith.constant 0 : i32
    %c0_i32_1 = arith.constant 0 : i32
    return %c0_i32, %c0_i32_0 : i32, i32
  }
  func.func @transform_3(%arg0: i32, %arg1: i32) -> (i32, i32) {
    %c0_i32 = arith.constant 0 : i32
    %c0_i32_0 = arith.constant 0 : i32
    %c0_i32_1 = arith.constant 0 : i32
    return %c0_i32, %c0_i32_0 : i32, i32
  }
  func.func @transform_4(%arg0: i32, %arg1: i32) -> (i32, i32) {
    %c0_i32 = arith.constant 0 : i32
    %c0_i32_0 = arith.constant 0 : i32
    %c0_i32_1 = arith.constant 0 : i32
    return %c0_i32, %c0_i32_0 : i32, i32
  }
  func.func @transform_5(%arg0: i32, %arg1: i32) -> (i32, i32) {
    %c0_i32 = arith.constant 0 : i32
    %c0_i32_0 = arith.constant 0 : i32
    return %arg0, %c0_i32 : i32, i32
  }
}

</mosaic_0001>

<llo_original>
// kernel: tpu_custom_call.1
$region0: #{tpu_custom_call.1}
  #allocation0 [shape = 'u32[]', space=smem, size = 0x4, offset = 0x4, fixed_abs, tag = 'smem constant byte address 0x4 - core index']
  #allocation1 [shape = 'u32[144,128]{1,0:T(1,128)}', space=vmem, size = 0x12000, scoped, tag = 'internal scratch']
  %s0 = inlined_call_operand.vmem [shape: f32[32,16], index: 0, kind: input, shape index: {}]
  %s1 = inlined_call_operand.vmem [shape: bf16[16,32], index: 1, kind: input, shape index: {}]
  %s2 = inlined_call_operand.vmem [shape: bf16[16,32], index: 2, kind: input, shape index: {}]
  %s3 = inlined_call_operand.vmem [shape: f32[1,32], index: 3, kind: input, shape index: {}]
  %s4 = inlined_call_operand.vmem [shape: f32[1,32], index: 4, kind: input, shape index: {}]
  %s5 = inlined_call_operand.hbm [shape: bf16[32,32], index: 5, kind: output, shape index: {}]
  %s6 = sld [smem:[#allocation0]]
  $region53: #{tpu_custom_call.1} parent=0
    _
  %s8 = ssub.s32 1, %s6
  %s9 = scalar_select 0, %s8, %s6
  $region1: #{tpu_custom_call.1} parent=0
    #allocation2 [shape = 'u8[8192]{0}', space=vmem, size = 0x2000, scoped, tag = 'output window, operand 0']
    #allocation3 [shape = 's32[2]{0}', space=sflag, size = 0x8, scoped, tag = 'scoped memory for tpu_custom_call.1']
    %10 = vsyncpa [#allocation3], 0
    %s11 = scalar_lea.sflag [#allocation3], 1
    %12 = vsyncpa %s11, 0
    loop: start=0, step=1, limit=4
    $region2: #{tpu_custom_call.1} parent=1 // loop_pre_header
      _
    $region3: #{tpu_custom_call.1} parent=1 // loop_header
      %s14 = sphi 0, %s18
      %p15 = scmp.ge.s32.totalorder %s14, 4
      %s21 = sphi 0, %s33
      %s22 = sphi 0, %s29
      %s23 = sphi 0, %s21
      %s24 = sphi 0, %s22
      %s25 = sphi 0, %s23
      %s26 = sphi 0, %s24
      %s38 = sphi 0, %s40
      %s41 = sphi 0, %s38
      %s42 = sphi 0, %s41
      %s58 = sphi 0, %s42
      %s64 = sphi 0, %s66
      %s67 = sphi 0, %s64
      %s68 = sphi 0, %s67
      %s84 = sphi 0, %s68
      %s88 = sphi 0, %s88
      %s90 = sphi 0, %s88
      %s91 = sphi 0, %s90
      %s105 = sphi 0, %s91
      %s109 = sphi 0, %s109
      %s111 = sphi 0, %s109
      %s112 = sphi 0, %s111
      %s126 = sphi 0, %s112
      %s130 = sphi 0, %s130
      %s132 = sphi 0, %s130
      %s133 = sphi 0, %s132
      %s147 = sphi 0, %s133
      %s153 = sphi 0, %s155
      %s156 = sphi 0, %s153
      %s157 = sphi 0, %s156
      %s173 = sphi 0, %s157
    $region4: #{tpu_custom_call.1} parent=1 // loop_header_branch
      %17 = sbr.rel (%p15) target = $region8
    $region5: #{tpu_custom_call.1} parent=1 // loop_body
      %s19 = ssub.s32 %s14, 1
      %s20 = ssub.s32 %s14, 2
      %s27 = sadd.s32 1, %s22
      %p28 = scmp.ge.s32.totalorder %s27, 1
      %s29 = scalar_select %p28, 0, %s27
      %s30 = sadd.s32 1, %s21
      %s31 = scalar_select %p28, %s30, %s21
      %p32 = scmp.ge.s32.totalorder %s31, 2
      %s33 = scalar_select %p32, 0, %s31
      %s34 = ssub.s32 %s21, %s33
      %s35 = ssub.s32 %s22, %s29
      %s36 = sor.u32 %s34, %s35
      %p37 = scmp.eq.s32.totalorder %s36, 0
      %s39 = sadd.s32 %s38, 1
      %s40 = scalar_select %p37, %s38, %s39
      %p43 = pneg %p37
      %p44 = scmp.eq.s32.totalorder %s14, 1
      %p45 = por %p43, %p44
      %p46 = scmp.ne.s32.totalorder %s38, %s41
      %p47 = scmp.eq.s32.totalorder %s14, 0
      %p48 = por %p46, %p47
      %p49 = scmp.ne.s32.totalorder %s38, %s41
      %p50 = scmp.eq.s32.totalorder %s19, 1
      %p51 = por %p49, %p50
      %p52 = scmp.ne.s32.totalorder %s41, %s42
      %p53 = scmp.eq.s32.totalorder %s19, 0
      %p54 = por %p52, %p53
      %p55 = scmp.ne.s32.totalorder %s41, %s42
      %p56 = scmp.eq.s32.totalorder %s20, 1
      %p57 = por %p55, %p56
      %p59 = scmp.ne.s32.totalorder %s42, %s58
      %p60 = scmp.eq.s32.totalorder %s20, 0
      %p61 = por %p59, %p60
      %s62 = ssub.s32 %s22, %s29
      %p63 = scmp.eq.s32.totalorder %s62, 0
      %s65 = sadd.s32 %s64, 1
      %s66 = scalar_select %p63, %s64, %s65
      %p69 = pneg %p63
      %p70 = scmp.eq.s32.totalorder %s14, 1
      %p71 = por %p69, %p70
      %p72 = scmp.ne.s32.totalorder %s64, %s67
      %p73 = scmp.eq.s32.totalorder %s14, 0
      %p74 = por %p72, %p73
      %p75 = scmp.ne.s32.totalorder %s64, %s67
      %p76 = scmp.eq.s32.totalorder %s19, 1
      %p77 = por %p75, %p76
      %p78 = scmp.ne.s32.totalorder %s67, %s68
      %p79 = scmp.eq.s32.totalorder %s19, 0
      %p80 = por %p78, %p79
      %p81 = scmp.ne.s32.totalorder %s67, %s68
      %p82 = scmp.eq.s32.totalorder %s20, 1
      %p83 = por %p81, %p82
      %p85 = scmp.ne.s32.totalorder %s68, %s84
      %p86 = scmp.eq.s32.totalorder %s20, 0
      %p87 = por %p85, %p86
      %s89 = sadd.s32 %s88, 1
      %p92 = scmp.eq.s32.totalorder %s14, 1
      %p93 = scmp.ne.s32.totalorder %s88, %s90
      %p94 = scmp.eq.s32.totalorder %s14, 0
      %p95 = por %p93, %p94
      %p96 = scmp.ne.s32.totalorder %s88, %s90
      %p97 = scmp.eq.s32.totalorder %s19, 1
      %p98 = por %p96, %p97
      %p99 = scmp.ne.s32.totalorder %s90, %s91
      %p100 = scmp.eq.s32.totalorder %s19, 0
      %p101 = por %p99, %p100
      %p102 = scmp.ne.s32.totalorder %s90, %s91
      %p103 = scmp.eq.s32.totalorder %s20, 1
      %p104 = por %p102, %p103
      %p106 = scmp.ne.s32.totalorder %s91, %s105
      %p107 = scmp.eq.s32.totalorder %s20, 0
      %p108 = por %p106, %p107
      %s110 = sadd.s32 %s109, 1
      %p113 = scmp.eq.s32.totalorder %s14, 1
      %p114 = scmp.ne.s32.totalorder %s109, %s111
      %p115 = scmp.eq.s32.totalorder %s14, 0
      %p116 = por %p114, %p115
      %p117 = scmp.ne.s32.totalorder %s109, %s111
      %p118 = scmp.eq.s32.totalorder %s19, 1
      %p119 = por %p117, %p118
      %p120 = scmp.ne.s32.totalorder %s111, %s112
      %p121 = scmp.eq.s32.totalorder %s19, 0
      %p122 = por %p120, %p121
      %p123 = scmp.ne.s32.totalorder %s111, %s112
      %p124 = scmp.eq.s32.totalorder %s20, 1
      %p125 = por %p123, %p124
      %p127 = scmp.ne.s32.totalorder %s112, %s126
      %p128 = scmp.eq.s32.totalorder %s20, 0
      %p129 = por %p127, %p128
      %s131 = sadd.s32 %s130, 1
      %p134 = scmp.eq.s32.totalorder %s14, 1
      %p135 = scmp.ne.s32.totalorder %s130, %s132
      %p136 = scmp.eq.s32.totalorder %s14, 0
      %p137 = por %p135, %p136
      %p138 = scmp.ne.s32.totalorder %s130, %s132
      %p139 = scmp.eq.s32.totalorder %s19, 1
      %p140 = por %p138, %p139
      %p141 = scmp.ne.s32.totalorder %s132, %s133
      %p142 = scmp.eq.s32.totalorder %s19, 0
      %p143 = por %p141, %p142
      %p144 = scmp.ne.s32.totalorder %s132, %s133
      %p145 = scmp.eq.s32.totalorder %s20, 1
      %p146 = por %p144, %p145
      %p148 = scmp.ne.s32.totalorder %s133, %s147
      %p149 = scmp.eq.s32.totalorder %s20, 0
      %p150 = por %p148, %p149
      %s151 = ssub.s32 %s21, %s33
      %p152 = scmp.eq.s32.totalorder %s151, 0
      %s154 = sadd.s32 %s153, 1
      %s155 = scalar_select %p152, %s153, %s154
      %p158 = pneg %p152
      %p159 = scmp.eq.s32.totalorder %s14, 1
      %p160 = por %p158, %p159
      %p161 = scmp.ne.s32.totalorder %s153, %s156
      %p162 = scmp.eq.s32.totalorder %s14, 0
      %p163 = por %p161, %p162
      %p164 = scmp.ne.s32.totalorder %s153, %s156
      %p165 = scmp.eq.s32.totalorder %s19, 1
      %p166 = por %p164, %p165
      %p167 = scmp.ne.s32.totalorder %s156, %s157
      %p168 = scmp.eq.s32.totalorder %s19, 0
      %p169 = por %p167, %p168
      %p170 = scmp.ne.s32.totalorder %s156, %s157
      %p171 = scmp.eq.s32.totalorder %s20, 1
      %p172 = por %p170, %p171
      %p174 = scmp.ne.s32.totalorder %s157, %s173
      %p175 = scmp.eq.s32.totalorder %s20, 0
      %p176 = por %p174, %p175
      %p177 = scmp.le.s32.totalorder 1, %s14
      %p178 = scmp.lt.s32.totalorder %s14, 3
      %p179 = pnand %p177, %p178
      %p180 = pneg %p179
      // Predicated region
      $region9: #{tpu_custom_call.1} parent=5 // pred_check
        _
      $region10: #{tpu_custom_call.1} parent=5 // pred_check_branch
        %182 = sbr.rel (%p179) target = $region12
      $region11: #{tpu_custom_call.1} parent=5 // pred_region
        %s183 = ssub.s32 %s14, 1
        // Predicated region
        $region13: #{tpu_custom_call.1} parent=11 // pred_check
          %p184 = pneg %p80
        $region14: #{tpu_custom_call.1} parent=11 // pred_check_branch
          %186 = sbr.rel (%p184) target = $region16
        $region15: #{tpu_custom_call.1} parent=11 // pred_region
          %s187 = smul.u32 2, %s24
          %p188 = scmp.lt.s32.totalorder %s187, 1
          %s189 = scalar_select %p188, %s187, 1
          %s190 = smul.addr %s189, 4
          %s191 = scalar_lea.vmem %s1, %s190
          %s192 = smul.u32 2, %s24
        $region16: #{tpu_custom_call.1} parent=11 // pred_fallthru
          _
        // Predicated region
        $region17: #{tpu_custom_call.1} parent=11 // pred_check
          %p193 = pneg %p101
        $region18: #{tpu_custom_call.1} parent=11 // pred_check_branch
          %195 = sbr.rel (%p193) target = $region20
        $region19: #{tpu_custom_call.1} parent=11 // pred_region
          _
        $region20: #{tpu_custom_call.1} parent=11 // pred_fallthru
          _
        // Predicated region
        $region21: #{tpu_custom_call.1} parent=11 // pred_check
          %p196 = pneg %p122
        $region22: #{tpu_custom_call.1} parent=11 // pred_check_branch
          %198 = sbr.rel (%p196) target = $region24
        $region23: #{tpu_custom_call.1} parent=11 // pred_region
          _
        $region24: #{tpu_custom_call.1} parent=11 // pred_fallthru
          _
        // Predicated region
        $region25: #{tpu_custom_call.1} parent=11 // pred_check
          %p199 = pneg %p143
        $region26: #{tpu_custom_call.1} parent=11 // pred_check_branch
          %201 = sbr.rel (%p199) target = $region28
        $region27: #{tpu_custom_call.1} parent=11 // pred_region
          _
        $region28: #{tpu_custom_call.1} parent=11 // pred_fallthru
          _
      $region12: #{tpu_custom_call.1} parent=5 // pred_fallthru
        _
      %p202 = scmp.lt.s32.totalorder %s14, 2
      // Predicated region
      $region29: #{tpu_custom_call.1} parent=5 // pred_check
        %p203 = pneg %p202
      $region30: #{tpu_custom_call.1} parent=5 // pred_check_branch
        %205 = sbr.rel (%p203) target = $region32
      $region31: #{tpu_custom_call.1} parent=5 // pred_region
        // Predicated region
        $region33: #{tpu_custom_call.1} parent=31 // pred_check
          %p206 = pneg %p48
        $region34: #{tpu_custom_call.1} parent=31 // pred_check_branch
          %208 = sbr.rel (%p206) target = $region36
        $region35: #{tpu_custom_call.1} parent=31 // pred_region
          %s209 = smul.u32 2, %s21
          %p210 = scmp.lt.s32.totalorder %s209, 3
          %s211 = scalar_select %p210, %s209, 3
          %p212 = scmp.lt.s32.totalorder %s22, 0
          %s213 = scalar_select %p212, %s22, 0
          %s214 = sadd.s32 %s213, %s211
          %s215 = smul.addr %s214, 8
          %s216 = scalar_lea.vmem %s0, %s215
          %s217 = smul.u32 2, %s21
        $region36: #{tpu_custom_call.1} parent=31 // pred_fallthru
          _
      $region32: #{tpu_custom_call.1} parent=5 // pred_fallthru
        _
      %p218 = scmp.le.s32.totalorder 1, %s14
      %p219 = scmp.lt.s32.totalorder %s14, 3
      %p220 = pnand %p218, %p219
      %p221 = pneg %p220
      // Predicated region
      $region37: #{tpu_custom_call.1} parent=5 // pred_check
        _
      $region38: #{tpu_custom_call.1} parent=5 // pred_check_branch
        %223 = sbr.rel (%p220) target = $region40
      $region39: #{tpu_custom_call.1} parent=5 // pred_region
        %s224 = ssub.s32 %s14, 1
        %s225 = smul.u32 2, %s23
        %p226 = scmp.lt.s32.totalorder %s225, 3
        %s227 = scalar_select %p226, %s225, 3
        %p228 = scmp.lt.s32.totalorder %s24, 0
        %s229 = scalar_select %p228, %s24, 0
        %s230 = sadd.s32 %s229, %s227
        %s231 = smul.addr %s230, 8
        %s232 = scalar_lea.vmem %s0, %s231
        %p233 = pneg %p54
        %p234 = pneg %p51
        %s235 = smul.u32 2, %s24
        %p236 = scmp.lt.s32.totalorder %s235, 1
        %s237 = scalar_select %p236, %s235, 1
        %s238 = smul.addr %s237, 4
        %s239 = scalar_lea.vmem %s1, %s238
        %p240 = pneg %p80
        %p241 = pneg %p77
        %p242 = pneg %p101
        %p243 = pneg %p98
        %p244 = pneg %p122
        %p245 = pneg %p119
        %p246 = pneg %p143
        %p247 = pneg %p140
        %p248 = pneg %p169
        %p249 = pneg %p166
        %s250 = sand.u32 %s156, 1
        %s251 = scalar_lea.sflag [#allocation3], %s250
        %s252 = sand.u32 %s156, 1
        %s253 = smul.addr %s252, 8
        %s254 = scalar_lea.vmem [#allocation2], %s253
        %s255 = smul.u32 2, %s23
        %p256 = scmp.lt.s32.totalorder %s255, 3
        %s257 = scalar_select %p256, %s255, 3
        %p258 = scmp.lt.s32.totalorder %s24, 0
        %s259 = scalar_select %p258, %s24, 0
        %s260 = sadd.s32 %s259, %s257
        %s261 = smul.addr %s260, 8
        %s262 = scalar_lea.vmem %s0, %s261
        %s263 = smul.u32 2, %s23
        %s264 = smul.u32 2, %s24
        %p265 = scmp.lt.s32.totalorder %s264, 1
        %s266 = scalar_select %p265, %s264, 1
        %s267 = smul.addr %s266, 4
        %s268 = scalar_lea.vmem %s1, %s267
        %s269 = smul.u32 2, %s24
        %s270 = smul.u32 2, %s23
        %v272 = vld [vmem:[%s262] sm:$0xff]
        %v273 = vld [vmem:[%s262 + $0x8] sm:$0xff]
        %v274 = vpack.c.bf16 %v273, %v272
        %v275 = vld [vmem:[%s268] sm:$0xf]
        %v276 = vld [vmem:[%s268 + $0x4] sm:$0xf]
        %v277 = vld [vmem:[%s2] sm:$0xf]
        %v278 = vld [vmem:[%s2 + $0x4] sm:$0xf]
        %v279 = vunpack.c.l.bf16 %v277
        %v280 = vunpack.c.l.bf16 %v278
        %v283 = vunpack.c.l.b16 %v275
        %v284 = vunpack.c.l.b16 %v276
        %v285 = vpack.c.b16 %v284, %v283
        %vm287 = vcmask 130048
        %v289 = vsel %vm287, %v274, 0
        %291 = vmatprep.subr.bf16.mxu0 0
        %292 = vmatpush1.bf16.msra.mxu0 %v285
        %293 = vmatprep.subr.bf16.mxu0 0
        %294 = vmatpush1.bf16.msra.mxu0 0
        %295 = vmatprep.subr.bf16.mxu0 0
        %296 = vmatpush1.bf16.msra.mxu0 0
        %297 = vmatprep.subr.bf16.mxu0 0
        %298 = vmatpush1.bf16.msra.mxu0 0
        %299 = vmatprep.subr.bf16.mxu0 0
        %300 = vmatpush1.bf16.msra.mxu0 0
        %301 = vmatprep.subr.bf16.mxu0 0
        %302 = vmatpush1.bf16.msra.mxu0 0
        %303 = vmatprep.subr.bf16.mxu0 0
        %304 = vmatpush1.bf16.msra.mxu0 0
        %305 = vmatprep.subr.bf16.mxu0 0
        %306 = vmatpush1.bf16.msra.mxu0 0
        %307 = vmatprep.subr.bf16.mxu0 0
        %308 = vmatpush1.bf16.msra.mxu0 0
        %309 = vmatprep.subr.bf16.mxu0 0
        %310 = vmatpush1.bf16.msra.mxu0 0
        %311 = vmatprep.subr.bf16.mxu0 0
        %312 = vmatpush1.bf16.msra.mxu0 0
        %313 = vmatprep.subr.bf16.mxu0 0
        %314 = vmatpush1.bf16.msra.mxu0 0
        %315 = vmatprep.subr.bf16.mxu0 0
        %316 = vmatpush1.bf16.msra.mxu0 0
        %317 = vmatprep.subr.bf16.mxu0 0
        %318 = vmatpush1.bf16.msra.mxu0 0
        %319 = vmatprep.subr.bf16.mxu0 0
        %320 = vmatpush1.bf16.msra.mxu0 0
        %321 = vmatprep.subr.bf16.mxu0 0
        %322 = vmatpush1.bf16.msra.mxu0 0
        %323 = vmatprep.mubr.bf16.mxu0 0
        %324 = vmatmul.mubr.bf16.gmra.mrb[0].mxu0 %v289
        %v325 = vpop.f32.mrb[0].mxu0
        %v326 = vadd.f32 %v279, %v325
        %v327 = vpop.f32.mrb[0].mxu0
        %v328 = vpop.f32.mrb[0].mxu0
        %v329 = vadd.f32 %v280, %v328
        %v330 = vpop.f32.mrb[0].mxu0
        %331 = vdwg.mxu0
        %vm332 = vcmask 261120
        %v333 = vsel %vm332, %v326, 0.0
        %334 = vadd.xlane.f32.xlu0 %v333
        %v335 = vpop.xlane.xlu0 %334
        %v336 = vsel %vm332, %v329, 0.0
        %337 = vadd.xlane.f32.xlu0 %v336
        %v338 = vpop.xlane.xlu0 %337
        %v339 = vrcp.pop 32.0
        %v340 = vmul.f32 %v335, %v339
        %v341 = vmul.f32 %v338, %v339
        %v342 = vsub.f32 %v326, %v340
        %v343 = vsub.f32 %v329, %v341
        %v344 = vmul.f32 %v342, %v342
        %v345 = vmul.f32 %v343, %v343
        %v346 = vsel %vm332, %v344, 0.0
        %347 = vadd.xlane.f32.xlu0 %v346
        %v348 = vpop.xlane.xlu0 %347
        %v349 = vsel %vm332, %v345, 0.0
        %350 = vadd.xlane.f32.xlu0 %v349
        %v351 = vpop.xlane.xlu0 %350
        %v352 = vmul.f32 %v348, %v339
        %v353 = vmul.f32 %v351, %v339
        %v354 = vadd.f32 %v352, 1e-05
        %v355 = vadd.f32 %v353, 1e-05
        %v356 = vrsqrt.pop %v354
        %v357 = vrsqrt.pop %v355
        %v358 = vmul.f32 %v342, %v356
        %v359 = vmul.f32 %v343, %v357
        %v360 = vld [vmem:[%s3] sm:$0x1]
        %v362 = vlaneseq
        %v363 = vshrl.u32 %v362, 7
        %v364 = vsub.s32 0, %v363
        %v365 = vrot.slane %v360, %v364
        %v367 = vmul.f32 %v358, %v365
        %v368 = vmul.f32 %v359, %v365
        %v369 = vld [vmem:[%s4] sm:$0x1]
        %v371 = vlaneseq
        %v372 = vshrl.u32 %v371, 7
        %v373 = vsub.s32 0, %v372
        %v374 = vrot.slane %v369, %v373
        %v376 = vadd.f32 %v367, %v374
        %v377 = vadd.f32 %v368, %v374
        %v378 = vpack.c.bf16 %v377, %v376
        %v380 = vunpack.c.l.b16 %v378
        %v381 = vunpack.c.h.b16 %v378
        %v382 = vpack.c.b16 %v380, %v380
        %v383 = vpack.c.b16 %v381, %v381
        %vm386 = vcmask 257024
        %387 = vst.msk [vmem:[%s254] sm:$0xf] %vm386, %v382
        %388 = vst.msk [vmem:[%s254 + $0x4] sm:$0xf] %vm386, %v383
        %s389 = sand.u32 %s156, 1
        %s390 = scalar_lea.sflag [#allocation3], %s389
        %s391 = sand.u32 %s156, 1
        %s392 = smul.addr %s391, 8
        %s393 = scalar_lea.vmem [#allocation2], %s392
        // Predicated region
        $region41: #{tpu_custom_call.1} parent=39 // pred_check
          %p394 = pneg %p166
        $region42: #{tpu_custom_call.1} parent=39 // pred_check_branch
          %396 = sbr.rel (%p394) target = $region44
        $region43: #{tpu_custom_call.1} parent=39 // pred_region
          %s397 = smul.u32 2, %s23
          %s399 = ssub.s32 128, 128
          %400 = vsyncadd %s390, %s399
          %s401 = smul.addr %s397, 64
          %s402 = scalar_lea.hbm %s5, %s401
          %s403 = sshll.u32 %s393, 4
          %s404 = int_to_ptr.vmem [resolvable:$true] %s403
          %409 = dma.vmem_to_hbm [thread:$0]  %s404, 128, %s402, %s390, 64, 64, 4
        $region44: #{tpu_custom_call.1} parent=39 // pred_fallthru
          _
      $region40: #{tpu_custom_call.1} parent=5 // pred_fallthru
        _
      %p410 = scmp.le.s32.totalorder 2, %s14
      // Predicated region
      $region45: #{tpu_custom_call.1} parent=5 // pred_check
        %p411 = pneg %p410
      $region46: #{tpu_custom_call.1} parent=5 // pred_check_branch
        %413 = sbr.rel (%p411) target = $region48
      $region47: #{tpu_custom_call.1} parent=5 // pred_region
        %s414 = ssub.s32 %s14, 2
        // Predicated region
        $region49: #{tpu_custom_call.1} parent=47 // pred_check
          %p415 = pneg %p172
        $region50: #{tpu_custom_call.1} parent=47 // pred_check_branch
          %417 = sbr.rel (%p415) target = $region52
        $region51: #{tpu_custom_call.1} parent=47 // pred_region
          %s418 = sand.u32 %s157, 1
          %s419 = scalar_lea.sflag [#allocation3], %s418
          %s420 = sand.u32 %s157, 1
          %s421 = smul.addr %s420, 8
          %s422 = scalar_lea.vmem [#allocation2], %s421
          %423 = dma.done %s419, 128
        $region52: #{tpu_custom_call.1} parent=47 // pred_fallthru
          _
      $region48: #{tpu_custom_call.1} parent=5 // pred_fallthru
        _
    $region6: #{tpu_custom_call.1} parent=1 // loop_footer
      %s18 = sadd.s32 1, %s14
    $region7: #{tpu_custom_call.1} parent=1 // loop_footer_branch
      %13 = sbr.rel target = $region3
    $region8: #{tpu_custom_call.1} parent=1 // loop_exit
      _
    %424 = vsyncpa [#allocation3], 1
    %s425 = scalar_lea.sflag [#allocation3], 1
    %426 = vsyncpa %s425, 1

</llo_original>
